<compile_context>
chip_gen: v5e
topology: v5e:2x2
jax: 0.10.0
libtpu: 0.0.40
codegen_flags: <defaults>
</compile_context>

<pallas_src>
import jax
import jax.numpy as jnp
from jax.experimental import pallas as pl
from jax.experimental.pallas import tpu as pltpu


def _round_up(x: int, n: int) -> int:
    return ((x + n - 1) // n) * n


def _generator_kernel(z_ref, w_ref, b_ref, o_ref):
    # z_ref: (TM, Kp) bf16 noise tile
    # w_ref: (Kp, Np) bf16 folded weight (W * std)
    # b_ref: (1,  Np) f32 folded bias   (b * std + mean)
    # o_ref: (TM, Np) f32 output tile (lane-dense, Np multiple of 128)
    h = jnp.dot(z_ref[...], w_ref[...], preferred_element_type=jnp.float32)  # MXU, f32 acc
    o_ref[...] = h + b_ref[...]  # f32 epilogue; inverse_transform already folded in


def generator_forward(z, weight, bias, mean, std, *, tile_m=512):
    """z: (batch, n_lags, input_dim) -> (batch, n_lags, output_dim)."""
    batch, n_lags, d_in = z.shape
    d_out = weight.shape[1]
    m = batch * n_lags

    # Fold pipeline.inverse_transform (x * std + mean) into the linear map.
    std_f = std.astype(jnp.float32)
    w_fold = weight.astype(jnp.float32) * std_f[None, :]
    b_fold = bias.astype(jnp.float32) * std_f + mean.astype(jnp.float32)

    # Pad feature dims to lane/MXU-native multiples of 128 (zero padding keeps
    # the sliced-back result exact).
    k_pad = _round_up(d_in, 128)
    n_pad = _round_up(d_out, 128)

    # Tile the M axis; cap the tile so VMEM use is safe on v5e/v6e/v7x, and pad
    # M to a tile multiple so every grid step sees a full block.
    tm = min(tile_m, _round_up(m, 8))
    m_pad = _round_up(m, tm)
    grid_m = m_pad // tm

    z_bf16 = jnp.zeros((m_pad, k_pad), jnp.bfloat16)
    z_bf16 = z_bf16.at[:m, :d_in].set(z.reshape(m, d_in).astype(jnp.bfloat16))
    w_bf16 = jnp.zeros((k_pad, n_pad), jnp.bfloat16)
    w_bf16 = w_bf16.at[:d_in, :d_out].set(w_fold.astype(jnp.bfloat16))
    b_f32 = jnp.zeros((1, n_pad), jnp.float32).at[0, :d_out].set(b_fold)

    out2d = pl.pallas_call(
        _generator_kernel,
        out_shape=jax.ShapeDtypeStruct((m_pad, n_pad), jnp.float32),
        grid=(grid_m,),
        in_specs=[
            pl.BlockSpec((tm, k_pad), lambda i: (i, 0)),       # noise tile, marches over M
            pl.BlockSpec((k_pad, n_pad), lambda i: (0, 0)),    # folded weight, resident
            pl.BlockSpec((1, n_pad), lambda i: (0, 0)),        # folded bias, resident
        ],
        out_specs=pl.BlockSpec((tm, n_pad), lambda i: (i, 0)),
        compiler_params=pltpu.CompilerParams(
            dimension_semantics=("parallel",)),                # independent M tiles -> 2-TC on v7x
    )(z_bf16, w_bf16, b_f32)

    return out2d[:m, :d_out].reshape(batch, n_lags, d_out)


if __name__ == "__main__":
    # GeneratorBase(input_dim, output_dim) -- small demo shapes.
    input_dim = 32
    output_dim = 4
    batch_size = 2
    n_lags = 8

    key = jax.random.PRNGKey(0)
    k_noise, k_w, k_b, k_mean, k_std = jax.random.split(key, 5)

    # Deterministic synthetic parameters (shapes implied by the module).
    weight = jax.random.normal(k_w, (input_dim, output_dim), jnp.float32) * 0.1
    bias = jax.random.normal(k_b, (output_dim,), jnp.float32) * 0.01
    pipe_mean = jax.random.normal(k_mean, (output_dim,), jnp.float32)
    pipe_std = jax.nn.softplus(jax.random.normal(k_std, (output_dim,), jnp.float32)) + 0.5

    # forward_ noise source (the "generation scheme" latent).
    z = jax.random.normal(k_noise, (batch_size, n_lags, input_dim), jnp.float32)

    out = generator_forward(z, weight, bias, pipe_mean, pipe_std)
    out = jax.block_until_ready(out)

    # Reference in plain JAX, applying the same bf16 rounding to the MXU operands.
    w_fold_ref = weight * pipe_std[None, :]
    b_fold_ref = bias * pipe_std + pipe_mean
    z_r = z.reshape(-1, input_dim).astype(jnp.bfloat16).astype(jnp.float32)
    w_r = w_fold_ref.astype(jnp.bfloat16).astype(jnp.float32)
    ref = (z_r @ w_r + b_fold_ref).reshape(batch_size, n_lags, output_dim)

    assert out.shape == (batch_size, n_lags, output_dim)
    assert jnp.allclose(out, ref, atol=1e-4, rtol=1e-4), "mismatch vs reference"

    print("KERNEL_OK")
</pallas_src>

<mosaic_0001>
module attributes {stable_mosaic.version = 11 : i64} {
  func.func @_generator_kernel(%arg0: i32, %arg1: memref<16x128xbf16, #tpu.memory_space<vmem>>, %arg2: memref<128x128xbf16, #tpu.memory_space<vmem>>, %arg3: memref<1x128xf32, #tpu.memory_space<vmem>>, %arg4: memref<16x128xf32, #tpu.memory_space<vmem>>) attributes {dimension_semantics = [#tpu.dimension_semantics<parallel>], iteration_bounds = array<i64: 1>, scalar_prefetch = 0 : i64, scratch_operands = 0 : i64, tpu.core_type = #tpu.core_type<tc>, window_params = [{transform_indices = @transform_0, window_bounds = array<i64: 16, 128>}, {pipeline_mode = #tpu.pipeline_mode<synchronous>, transform_indices = @transform_1, window_bounds = array<i64: 128, 128>}, {pipeline_mode = #tpu.pipeline_mode<synchronous>, transform_indices = @transform_2, window_bounds = array<i64: 1, 128>}, {transform_indices = @transform_3, window_bounds = array<i64: 16, 128>}]} {
    %c0 = arith.constant 0 : index
    %c0_0 = arith.constant 0 : index
    %0 = vector.load %arg1[%c0, %c0_0] : memref<16x128xbf16, #tpu.memory_space<vmem>>, vector<16x128xbf16>
    %c0_1 = arith.constant 0 : index
    %c0_2 = arith.constant 0 : index
    %1 = vector.load %arg2[%c0_1, %c0_2] : memref<128x128xbf16, #tpu.memory_space<vmem>>, vector<128x128xbf16>
    %cst = arith.constant dense<0.000000e+00> : vector<16x128xf32>
    %2 = tpu.matmul %0, %1, %cst {dimension_numbers = #tpu.dot_dimension_numbers<[1], [0], [0], [1], [0, 0, 1, 1], [], []>} : vector<16x128xbf16>, vector<128x128xbf16>, vector<16x128xf32> -> vector<16x128xf32>
    %c0_3 = arith.constant 0 : index
    %c0_4 = arith.constant 0 : index
    %3 = vector.load %arg3[%c0_3, %c0_4] : memref<1x128xf32, #tpu.memory_space<vmem>>, vector<1x128xf32>
    %4 = vector.broadcast %3 : vector<1x128xf32> to vector<16x128xf32>
    %5 = arith.addf %2, %4 : vector<16x128xf32>
    %c0_5 = arith.constant 0 : index
    %c0_6 = arith.constant 0 : index
    %6 = vector.load %arg4[%c0_5, %c0_6] : memref<16x128xf32, #tpu.memory_space<vmem>>, vector<16x128xf32>
    tpu.vector_store %arg4[%c0_5, %c0_6], %5 {strides = array<i32>} : memref<16x128xf32, #tpu.memory_space<vmem>>, vector<16x128xf32>,
    return
  }
  func.func @transform_0(%arg0: i32) -> (i32, i32) {
    %c0_i32 = arith.constant 0 : i32
    %c0_i32_0 = arith.constant 0 : i32
    return %arg0, %c0_i32 : i32, i32
  }
  func.func @transform_1(%arg0: i32) -> (i32, i32) {
    %c0_i32 = arith.constant 0 : i32
    %c0_i32_0 = arith.constant 0 : i32
    %c0_i32_1 = arith.constant 0 : i32
    return %c0_i32, %c0_i32_0 : i32, i32
  }
  func.func @transform_2(%arg0: i32) -> (i32, i32) {
    %c0_i32 = arith.constant 0 : i32
    %c0_i32_0 = arith.constant 0 : i32
    %c0_i32_1 = arith.constant 0 : i32
    return %c0_i32, %c0_i32_0 : i32, i32
  }
  func.func @transform_3(%arg0: i32) -> (i32, i32) {
    %c0_i32 = arith.constant 0 : i32
    %c0_i32_0 = arith.constant 0 : i32
    return %arg0, %c0_i32 : i32, i32
  }
}

</mosaic_0001>

<llo_original>
// kernel: tpu_custom_call.1
$region0: #{tpu_custom_call.1}
  #allocation0 [shape = 'u32[]', space=smem, size = 0x4, offset = 0x4, fixed_abs, tag = 'smem constant byte address 0x4 - core index']
  #allocation1 [shape = 'u32[72,128]{1,0:T(1,128)}', space=vmem, size = 0x9000, scoped, tag = 'internal scratch']
  %s0 = inlined_call_operand.hbm [shape: bf16[16,128], index: 0, kind: input, shape index: {}]
  %s1 = inlined_call_operand.hbm [shape: bf16[128,128], index: 1, kind: input, shape index: {}]
  %s2 = inlined_call_operand.vmem [shape: f32[1,128], index: 2, kind: input, shape index: {}]
  %s3 = inlined_call_operand.hbm [shape: f32[16,128], index: 3, kind: output, shape index: {}]
  %s4 = sld [smem:[#allocation0]]
  $region30: #{tpu_custom_call.1} parent=0
    _
  %s6 = ssub.s32 1, %s4
  %s7 = scalar_select 0, %s6, %s4
  $region1: #{tpu_custom_call.1} parent=0
    #allocation2 [shape = 'u8[4096]{0}', space=vmem, size = 0x1000, scoped, tag = 'input window, operand 0, single buffered']
    #allocation3 [shape = 's32[1]{0}', space=sflag, size = 0x4, scoped, tag = 'scoped memory for tpu_custom_call.1']
    #allocation4 [shape = 's32[1]{0}', space=sflag, size = 0x4, scoped, tag = 'scoped memory for tpu_custom_call.1']
    #allocation5 [shape = 'u8[32768]{0}', space=vmem, size = 0x8000, scoped, tag = 'input window, operand 1, single buffered']
    #allocation6 [shape = 's32[1]{0}', space=sflag, size = 0x4, scoped, tag = 'scoped memory for tpu_custom_call.1']
    #allocation7 [shape = 'u8[8192]{0}', space=vmem, size = 0x2000, scoped, tag = 'output window, operand 0, single buffered']
    %8 = vsyncpa [#allocation3], 0
    %9 = vsyncpa [#allocation6], 0
    %10 = vsyncpa [#allocation4], 0
    // Predicated region
    $region2: #{tpu_custom_call.1} parent=1 // pred_check
      _
    $region3: #{tpu_custom_call.1} parent=1 // pred_check_branch
      %12 = sbr.rel (0) target = $region5
    $region4: #{tpu_custom_call.1} parent=1 // pred_region
      %14 = vsyncadd [#allocation3], 0
      %s15 = sshll.u32 %s0, 4
      %s16 = int_to_ptr.hbm [resolvable:$true] %s15
      %s17 = sshll.u32 [#allocation2], 4
      %s18 = int_to_ptr.vmem [resolvable:$true] %s17
      %23 = dma.hbm_to_vmem [thread:$0]  %s16, 128, %s18, [#allocation3], 64, 64, 4
    $region5: #{tpu_custom_call.1} parent=1 // pred_fallthru
      _
    // Predicated region
    $region6: #{tpu_custom_call.1} parent=1 // pred_check
      _
    $region7: #{tpu_custom_call.1} parent=1 // pred_check_branch
      %25 = sbr.rel (0) target = $region9
    $region8: #{tpu_custom_call.1} parent=1 // pred_region
      %27 = vsyncadd [#allocation6], 0
      %s28 = sshll.u32 %s1, 4
      %s29 = int_to_ptr.hbm [resolvable:$true] %s28
      %s30 = sshll.u32 [#allocation5], 4
      %s31 = int_to_ptr.vmem [resolvable:$true] %s30
      %36 = dma.hbm_to_vmem [thread:$0]  %s29, 1024, %s31, [#allocation6], 64, 64, 4
    $region9: #{tpu_custom_call.1} parent=1 // pred_fallthru
      _
    // Predicated region
    $region10: #{tpu_custom_call.1} parent=1 // pred_check
      _
    $region11: #{tpu_custom_call.1} parent=1 // pred_check_branch
      %38 = sbr.rel (0) target = $region13
    $region12: #{tpu_custom_call.1} parent=1 // pred_region
      _
    $region13: #{tpu_custom_call.1} parent=1 // pred_fallthru
      _
    // Predicated region
    $region14: #{tpu_custom_call.1} parent=1 // pred_check
      _
    $region15: #{tpu_custom_call.1} parent=1 // pred_check_branch
      %40 = sbr.rel (0) target = $region17
    $region16: #{tpu_custom_call.1} parent=1 // pred_region
      %42 = dma.done [#allocation3], 128
    $region17: #{tpu_custom_call.1} parent=1 // pred_fallthru
      _
    // Predicated region
    $region18: #{tpu_custom_call.1} parent=1 // pred_check
      _
    $region19: #{tpu_custom_call.1} parent=1 // pred_check_branch
      %44 = sbr.rel (0) target = $region21
    $region20: #{tpu_custom_call.1} parent=1 // pred_region
      %46 = dma.done [#allocation6], 1024
    $region21: #{tpu_custom_call.1} parent=1 // pred_fallthru
      _
    %v47 = vld [vmem:[#allocation2] sm:$0xf]
    %v48 = vld [vmem:[#allocation2 + $0x4] sm:$0xf]
    %v49 = vld [vmem:[#allocation5] sm:$0xf]
    %v50 = vld [vmem:[#allocation5 + $0x4] sm:$0xf]
    %v51 = vld [vmem:[#allocation5 + $0x8] sm:$0xf]
    %v52 = vld [vmem:[#allocation5 + $0xc] sm:$0xf]
    %v53 = vld [vmem:[#allocation5 + $0x10] sm:$0xf]
    %v54 = vld [vmem:[#allocation5 + $0x14] sm:$0xf]
    %v55 = vld [vmem:[#allocation5 + $0x18] sm:$0xf]
    %v56 = vld [vmem:[#allocation5 + $0x1c] sm:$0xf]
    %v57 = vld [vmem:[#allocation5 + $0x20] sm:$0xf]
    %v58 = vld [vmem:[#allocation5 + $0x24] sm:$0xf]
    %v59 = vld [vmem:[#allocation5 + $0x28] sm:$0xf]
    %v60 = vld [vmem:[#allocation5 + $0x2c] sm:$0xf]
    %v61 = vld [vmem:[#allocation5 + $0x30] sm:$0xf]
    %v62 = vld [vmem:[#allocation5 + $0x34] sm:$0xf]
    %v63 = vld [vmem:[#allocation5 + $0x38] sm:$0xf]
    %v64 = vld [vmem:[#allocation5 + $0x3c] sm:$0xf]
    %v65 = vld [vmem:[%s2] sm:$0x1]
    %v67 = vperm.slane %v65, 0
    %v71 = vunpack.c.l.b16 %v47
    %v72 = vunpack.c.l.b16 %v48
    %v73 = vpack.c.b16 %v72, %v71
    %v91 = vunpack.c.l.b16 %v49
    %v92 = vunpack.c.l.b16 %v50
    %v93 = vunpack.c.l.b16 %v51
    %v94 = vunpack.c.l.b16 %v52
    %v95 = vunpack.c.l.b16 %v53
    %v96 = vunpack.c.l.b16 %v54
    %v97 = vunpack.c.l.b16 %v55
    %v98 = vunpack.c.l.b16 %v56
    %v99 = vunpack.c.l.b16 %v57
    %v100 = vunpack.c.l.b16 %v58
    %v101 = vunpack.c.l.b16 %v59
    %v102 = vunpack.c.l.b16 %v60
    %v103 = vunpack.c.l.b16 %v61
    %v104 = vunpack.c.l.b16 %v62
    %v105 = vunpack.c.l.b16 %v63
    %v106 = vunpack.c.l.b16 %v64
    %v107 = vpack.c.b16 %v92, %v91
    %v108 = vpack.c.b16 %v94, %v93
    %v109 = vpack.c.b16 %v96, %v95
    %v110 = vpack.c.b16 %v98, %v97
    %v111 = vpack.c.b16 %v100, %v99
    %v112 = vpack.c.b16 %v102, %v101
    %v113 = vpack.c.b16 %v104, %v103
    %v114 = vpack.c.b16 %v106, %v105
    %123 = vmatpush.bf16.msra.mxu0 %v114
    %124 = vmatpush.bf16.msra.mxu0 %v113
    %125 = vmatpush.bf16.msra.mxu0 %v112
    %126 = vmatpush.bf16.msra.mxu0 %v111
    %127 = vmatpush.bf16.msra.mxu0 %v110
    %128 = vmatpush.bf16.msra.mxu0 %v109
    %129 = vmatpush.bf16.msra.mxu0 %v108
    %130 = vmatpush.bf16.msra.mxu0 %v107
    %131 = vmatmul.bf16.gmra.mxu0 %v73
    %v132 = vpop.f32.mrf.mxu0
    %v133 = vadd.f32 %v67, %v132
    %v134 = vpop.f32.mrf.mxu0
    %v135 = vadd.f32 %v67, %v134
    %136 = vdwg.mxu0
    %137 = vst [vmem:[#allocation7] sm:$0xff] %v133
    %138 = vst [vmem:[#allocation7 + $0x8] sm:$0xff] %v135
    // Predicated region
    $region22: #{tpu_custom_call.1} parent=1 // pred_check
      _
    $region23: #{tpu_custom_call.1} parent=1 // pred_check_branch
      %140 = sbr.rel (0) target = $region25
    $region24: #{tpu_custom_call.1} parent=1 // pred_region
      %142 = vsyncadd [#allocation4], 0
      %s143 = sshll.u32 [#allocation7], 4
      %s144 = int_to_ptr.vmem [resolvable:$true] %s143
      %s145 = sshll.u32 %s3, 4
      %s146 = int_to_ptr.hbm [resolvable:$true] %s145
      %151 = dma.vmem_to_hbm [thread:$0]  %s144, 256, %s146, [#allocation4], 128, 128, 8
    $region25: #{tpu_custom_call.1} parent=1 // pred_fallthru
      _
    // Predicated region
    $region26: #{tpu_custom_call.1} parent=1 // pred_check
      _
    $region27: #{tpu_custom_call.1} parent=1 // pred_check_branch
      %153 = sbr.rel (0) target = $region29
    $region28: #{tpu_custom_call.1} parent=1 // pred_region
      %155 = dma.done [#allocation4], 256
    $region29: #{tpu_custom_call.1} parent=1 // pred_fallthru
      _
    %156 = vsyncpa [#allocation3], 1
    %157 = vsyncpa [#allocation6], 1
    %158 = vsyncpa [#allocation4], 1

</llo_original>
